<compile_context>
chip_gen: v7x
topology: tpu7x:2x2x1
jax: 0.10.0
libtpu: 0.0.40
codegen_flags: <defaults>
</compile_context>

<pallas_src>
import functools

import jax
import jax.numpy as jnp
from jax import lax
from jax.experimental import pallas as pl
from jax.experimental.pallas import tpu as pltpu


def _branches(p_ref, w_ref, c_in):
    """Conv (matmul) + max-pool branches on one (9*C_in, L) tap tile."""
    p = p_ref[...]                                     # (9*C_in, L), -inf pads
    # Conv branch: padded taps contribute 0 (PyTorch zero padding).
    p_conv = jnp.where(p == -jnp.inf, 0.0, p)
    main = jnp.dot(w_ref[...], p_conv,
                   preferred_element_type=jnp.float32)          # (C_conv, L)
    # Pool branch: balanced-tree max over the 9 taps (-inf pads never win).
    slabs = [p[t * c_in:(t + 1) * c_in, :] for t in range(9)]
    while len(slabs) > 1:
        nxt = [jnp.maximum(slabs[i], slabs[i + 1])
               for i in range(0, len(slabs) - 1, 2)]
        if len(slabs) % 2:
            nxt.append(slabs[-1])
        slabs = nxt
    ext = slabs[0]                                               # (C_in, L)
    return jnp.concatenate([main, ext], axis=0)                  # (C_out, L)


def _stats_kernel(p_ref, w_ref, stats_ref, *, c_in):
    """Accumulate per-channel [sum, sum-of-squares] of the pre-BN activations."""
    pre = _branches(p_ref, w_ref, c_in)                          # (C_out, L)

    @pl.when(jnp.logical_and(pl.program_id(0) == 0, pl.program_id(1) == 0))
    def _():
        stats_ref[...] = jnp.zeros_like(stats_ref)

    s1 = jnp.sum(pre, axis=1, keepdims=True)                     # (C_out, 1)
    s2 = jnp.sum(pre * pre, axis=1, keepdims=True)               # (C_out, 1)
    stats_ref[...] += jnp.concatenate([s1, s2], axis=1)          # (C_out, 2)


def _apply_kernel(p_ref, w_ref, stats_ref, gamma_ref, beta_ref, out_ref,
                  *, c_in, inv_count, eps):
    """Recompute branches, batch-norm (batch stats) + ReLU, single store."""
    pre = _branches(p_ref, w_ref, c_in)                          # (C_out, L)
    mean = stats_ref[:, 0:1] * inv_count                         # (C_out, 1)
    var = stats_ref[:, 1:2] * inv_count - mean * mean            # biased var
    scale = gamma_ref[...] * lax.rsqrt(var + eps)
    shift = beta_ref[...] - mean * scale
    out_ref[...] = jnp.maximum(pre * scale + shift, 0.0)
    # TODO(synk): PReLU path (relu=False ctor arg) not implemented; the module
    # default relu=True (plain ReLU) is what is reproduced here.


def _pick_tile(s, max_tile=2048):
    """Largest multiple of 128 that divides s (<= max_tile); else full extent.

    Tile footprint stays < 1 MiB, safely inside v7x's 64 MiB per-TC VMEM."""
    best = None
    t = 128
    while t <= min(s, max_tile):
        if s % t == 0:
            best = t
        t += 128
    return best if best is not None else s


def initial_block(x, w, gamma, beta, eps=1e-5):
    """x: (N, C_in, H, W) f32, w: (C_out-3, C_in, 3, 3), gamma/beta: (C_out,)."""
    N, C_in, H, W = x.shape
    C_conv = w.shape[0]
    C_out = C_conv + C_in
    Ho = (H - 1) // 2 + 1
    Wo = (W - 1) // 2 + 1
    S = Ho * Wo
    L = _pick_tile(S)
    T = S // L
    R = N * S

    x = x.astype(jnp.float32)
    # Single shared tap array, -inf padded (pool semantics); conv zeroes the
    # pads in-kernel.  Layout (N, 9*C_in, Ho*Wo): pixels on the lane axis, and
    # the kernel output comes back already in NCHW order (no transposes).
    x_pad = jnp.pad(x, ((0, 0), (0, 0), (1, 1), (1, 1)),
                    constant_values=-jnp.inf)
    taps = [x_pad[:, :, dh:dh + 2 * Ho - 1:2, dw:dw + 2 * Wo - 1:2]
            for dh in range(3) for dw in range(3)]      # 9 x (N, C_in, Ho, Wo)
    patches = jnp.stack(taps, axis=1).reshape(N, 9 * C_in, S)

    # PyTorch OIHW -> (C_conv, tap-major * C_in), matching the patch row order.
    w_mat = jnp.transpose(w, (0, 2, 3, 1)).reshape(C_conv, 9 * C_in)
    w_mat = w_mat.astype(jnp.float32)
    gamma2 = gamma.reshape(C_out, 1).astype(jnp.float32)
    beta2 = beta.reshape(C_out, 1).astype(jnp.float32)

    p_spec = pl.BlockSpec((None, 9 * C_in, L), lambda n, t: (n, 0, t))
    w_spec = pl.BlockSpec((C_conv, 9 * C_in), lambda n, t: (0, 0))

    def bcast(shape):
        return pl.BlockSpec(shape, lambda n, t: (0, 0))

    # Pass 1: batch statistics, accumulated in a grid-resident output block.
    stats = pl.pallas_call(
        functools.partial(_stats_kernel, c_in=C_in),
        out_shape=jax.ShapeDtypeStruct((C_out, 2), jnp.float32),
        grid=(N, T),
        in_specs=[p_spec, w_spec],
        out_specs=bcast((C_out, 2)),
        compiler_params=pltpu.CompilerParams(
            dimension_semantics=("arbitrary", "arbitrary")),
    )(patches, w_mat)

    # Pass 2: normalize + affine + ReLU, one lane-dense store per tile.
    out = pl.pallas_call(
        functools.partial(_apply_kernel, c_in=C_in,
                          inv_count=1.0 / R, eps=eps),
        out_shape=jax.ShapeDtypeStruct((N, C_out, S), jnp.float32),
        grid=(N, T),
        in_specs=[p_spec, w_spec, bcast((C_out, 2)),
                  bcast((C_out, 1)), bcast((C_out, 1))],
        out_specs=pl.BlockSpec((None, C_out, L), lambda n, t: (n, 0, t)),
        compiler_params=pltpu.CompilerParams(
            dimension_semantics=("parallel", "parallel")),
    )(patches, w_mat, stats, gamma2, beta2)

    return out.reshape(N, C_out, Ho, Wo)


def _reference(x, w, gamma, beta, eps):
    """Pure-JAX reference (independent of the tap/im2col path)."""
    main = lax.conv_general_dilated(
        x, w, window_strides=(2, 2), padding=((1, 1), (1, 1)),
        dimension_numbers=("NCHW", "OIHW", "NCHW"),
        precision=lax.Precision.HIGHEST)
    ext = lax.reduce_window(x, -jnp.inf, lax.max,
                            (1, 1, 3, 3), (1, 1, 2, 2),
                            ((0, 0), (0, 0), (1, 1), (1, 1)))
    out = jnp.concatenate([main, ext], axis=1)
    mean = out.mean(axis=(0, 2, 3), keepdims=True)
    var = ((out - mean) ** 2).mean(axis=(0, 2, 3), keepdims=True)
    out = (out - mean) * lax.rsqrt(var + eps)
    out = out * gamma[None, :, None, None] + beta[None, :, None, None]
    return jnp.maximum(out, 0.0)


if __name__ == "__main__":
    key = jax.random.PRNGKey(0)
    k_x, k_w = jax.random.split(key)

    # InitialBlock(in_channels=3, out_channels=16): the concat + BN requires
    # in_channels == 3, as in ENet.
    N, C_in, H, W = 2, 3, 16, 16
    C_out = 16
    C_conv = C_out - 3

    x = jax.random.normal(k_x, (N, C_in, H, W), dtype=jnp.float32)
    w = 0.1 * jax.random.normal(k_w, (C_conv, C_in, 3, 3), dtype=jnp.float32)
    gamma = 1.0 + 0.05 * jnp.arange(C_out, dtype=jnp.float32)
    beta = 0.02 * jnp.arange(C_out, dtype=jnp.float32) - 0.1

    out = jax.block_until_ready(initial_block(x, w, gamma, beta))
    assert out.shape == (N, C_out, H // 2, W // 2), out.shape
    ref = _reference(x, w, gamma, beta, 1e-5)
    err = float(jnp.max(jnp.abs(out - ref)))
    assert jnp.allclose(out, ref, atol=2e-3, rtol=2e-3), err

    # Larger spatial size: exercises the (batch, spatial-tile) grid (T > 1),
    # lane-dense 2048-wide tiles and the cross-tile BN-stat accumulation.
    x2 = jax.random.normal(jax.random.PRNGKey(1), (2, C_in, 128, 128),
                           dtype=jnp.float32)
    out2 = jax.block_until_ready(initial_block(x2, w, gamma, beta))
    ref2 = _reference(x2, w, gamma, beta, 1e-5)
    err2 = float(jnp.max(jnp.abs(out2 - ref2)))
    assert jnp.allclose(out2, ref2, atol=2e-3, rtol=2e-3), err2

    print("KERNEL_OK")
</pallas_src>

<mosaic_0001>
module attributes {stable_mosaic.version = 11 : i64} {
  func.func @_stats_kernel(%arg0: i32, %arg1: i32, %arg2: memref<1x27x64xf32, #tpu.memory_space<vmem>>, %arg3: memref<13x27xf32, #tpu.memory_space<vmem>>, %arg4: memref<16x2xf32, #tpu.memory_space<vmem>>) attributes {dimension_semantics = [#tpu.dimension_semantics<arbitrary>, #tpu.dimension_semantics<arbitrary>], iteration_bounds = array<i64: 2, 1>, scalar_prefetch = 0 : i64, scratch_operands = 0 : i64, tpu.core_type = #tpu.core_type<tc>, window_params = [{transform_indices = @transform_0, window_bounds = array<i64: 1, 27, 64>}, {pipeline_mode = #tpu.pipeline_mode<synchronous>, transform_indices = @transform_1, window_bounds = array<i64: 13, 27>}, {pipeline_mode = #tpu.pipeline_mode<synchronous>, transform_indices = @transform_2, window_bounds = array<i64: 16, 2>}]} {
    %c0 = arith.constant 0 : index
    %c0_0 = arith.constant 0 : index
    %c0_1 = arith.constant 0 : index
    %0 = vector.load %arg2[%c0, %c0_0, %c0_1] : memref<1x27x64xf32, #tpu.memory_space<vmem>>, vector<1x27x64xf32>
    %1 = vector.shape_cast %0 : vector<1x27x64xf32> to vector<27x64xf32>
    %cst = arith.constant 0xFF800000 : f32
    %2 = vector.broadcast %cst : f32 to vector<27x64xf32>
    %3 = arith.cmpf oeq, %1, %2 : vector<27x64xf32>
    %cst_2 = arith.constant 0.000000e+00 : f32
    %4 = vector.broadcast %cst_2 : f32 to vector<27x64xf32>
    %5 = arith.select %3, %4, %1 : vector<27x64xi1>, vector<27x64xf32>
    %c0_3 = arith.constant 0 : index
    %c0_4 = arith.constant 0 : index
    %6 = vector.load %arg3[%c0_3, %c0_4] : memref<13x27xf32, #tpu.memory_space<vmem>>, vector<13x27xf32>
    %cst_5 = arith.constant dense<0.000000e+00> : vector<13x64xf32>
    %7 = tpu.matmul %6, %5, %cst_5 {dimension_numbers = #tpu.dot_dimension_numbers<[1], [0], [0], [1], [0, 0, 1, 1], [], []>} : vector<13x27xf32>, vector<27x64xf32>, vector<13x64xf32> -> vector<13x64xf32>
    %8 = vector.extract_strided_slice %1 {offsets = [0, 0], sizes = [3, 64], strides = [1, 1]} : vector<27x64xf32> to vector<3x64xf32>
    %9 = vector.extract_strided_slice %1 {offsets = [3, 0], sizes = [3, 64], strides = [1, 1]} : vector<27x64xf32> to vector<3x64xf32>
    %10 = vector.extract_strided_slice %1 {offsets = [6, 0], sizes = [3, 64], strides = [1, 1]} : vector<27x64xf32> to vector<3x64xf32>
    %11 = vector.extract_strided_slice %1 {offsets = [9, 0], sizes = [3, 64], strides = [1, 1]} : vector<27x64xf32> to vector<3x64xf32>
    %12 = vector.extract_strided_slice %1 {offsets = [12, 0], sizes = [3, 64], strides = [1, 1]} : vector<27x64xf32> to vector<3x64xf32>
    %13 = vector.extract_strided_slice %1 {offsets = [15, 0], sizes = [3, 64], strides = [1, 1]} : vector<27x64xf32> to vector<3x64xf32>
    %14 = vector.extract_strided_slice %1 {offsets = [18, 0], sizes = [3, 64], strides = [1, 1]} : vector<27x64xf32> to vector<3x64xf32>
    %15 = vector.extract_strided_slice %1 {offsets = [21, 0], sizes = [3, 64], strides = [1, 1]} : vector<27x64xf32> to vector<3x64xf32>
    %16 = vector.extract_strided_slice %1 {offsets = [24, 0], sizes = [3, 64], strides = [1, 1]} : vector<27x64xf32> to vector<3x64xf32>
    %17 = arith.maximumf %8, %9 : vector<3x64xf32>
    %18 = arith.maximumf %10, %11 : vector<3x64xf32>
    %19 = arith.maximumf %12, %13 : vector<3x64xf32>
    %20 = arith.maximumf %14, %15 : vector<3x64xf32>
    %21 = arith.maximumf %17, %18 : vector<3x64xf32>
    %22 = arith.maximumf %19, %20 : vector<3x64xf32>
    %23 = arith.maximumf %21, %22 : vector<3x64xf32>
    %24 = arith.maximumf %23, %16 : vector<3x64xf32>
    %25 = tpu.concatenate %7, %24 in 0 : vector<13x64xf32>, vector<3x64xf32> -> vector<16x64xf32>
    %c0_i32 = arith.constant 0 : i32
    %26 = arith.cmpi eq, %arg0, %c0_i32 : i32
    %c0_i32_6 = arith.constant 0 : i32
    %27 = arith.cmpi eq, %arg1, %c0_i32_6 : i32
    %28 = arith.andi %26, %27 : i1
    %29 = arith.extui %28 : i1 to i32
    %c0_i32_7 = arith.constant 0 : i32
    %30 = arith.cmpi ne, %29, %c0_i32_7 : i32
    scf.if %30 {
      %cst_14 = arith.constant 0.000000e+00 : f32
      %40 = vector.broadcast %cst_14 : f32 to vector<16x2xf32>
      %c0_15 = arith.constant 0 : index
      %c0_16 = arith.constant 0 : index
      %41 = vector.load %arg4[%c0_15, %c0_16] : memref<16x2xf32, #tpu.memory_space<vmem>>, vector<16x2xf32>
      tpu.vector_store %arg4[%c0_15, %c0_16], %40 {strides = array<i32>} : memref<16x2xf32, #tpu.memory_space<vmem>>, vector<16x2xf32>,
    } else {
    }
    %cst_8 = arith.constant dense<0.000000e+00> : vector<16xf32>
    %31 = vector.multi_reduction <add>, %25, %cst_8 [1] : vector<16x64xf32> to vector<16xf32>
    %32 = vector.shape_cast %31 : vector<16xf32> to vector<16x1xf32>
    %33 = arith.mulf %25, %25 : vector<16x64xf32>
    %cst_9 = arith.constant dense<0.000000e+00> : vector<16xf32>
    %34 = vector.multi_reduction <add>, %33, %cst_9 [1] : vector<16x64xf32> to vector<16xf32>
    %35 = vector.shape_cast %34 : vector<16xf32> to vector<16x1xf32>
    %c0_10 = arith.constant 0 : index
    %c0_11 = arith.constant 0 : index
    %36 = vector.load %arg4[%c0_10, %c0_11] : memref<16x2xf32, #tpu.memory_space<vmem>>, vector<16x2xf32>
    %37 = tpu.concatenate %32, %35 in 1 : vector<16x1xf32>, vector<16x1xf32> -> vector<16x2xf32>
    %38 = arith.addf %36, %37 : vector<16x2xf32>
    %c0_12 = arith.constant 0 : index
    %c0_13 = arith.constant 0 : index
    %39 = vector.load %arg4[%c0_12, %c0_13] : memref<16x2xf32, #tpu.memory_space<vmem>>, vector<16x2xf32>
    tpu.vector_store %arg4[%c0_12, %c0_13], %38 {strides = array<i32>} : memref<16x2xf32, #tpu.memory_space<vmem>>, vector<16x2xf32>,
    return
  }
  func.func @transform_0(%arg0: i32, %arg1: i32) -> (i32, i32, i32) {
    %c0_i32 = arith.constant 0 : i32
    %c0_i32_0 = arith.constant 0 : i32
    return %arg0, %c0_i32, %arg1 : i32, i32, i32
  }
  func.func @transform_1(%arg0: i32, %arg1: i32) -> (i32, i32) {
    %c0_i32 = arith.constant 0 : i32
    %c0_i32_0 = arith.constant 0 : i32
    %c0_i32_1 = arith.constant 0 : i32
    return %c0_i32, %c0_i32_0 : i32, i32
  }
  func.func @transform_2(%arg0: i32, %arg1: i32) -> (i32, i32) {
    %c0_i32 = arith.constant 0 : i32
    %c0_i32_0 = arith.constant 0 : i32
    %c0_i32_1 = arith.constant 0 : i32
    return %c0_i32, %c0_i32_0 : i32, i32
  }
}

</mosaic_0001>

<llo_original>
// kernel: tpu_custom_call.1
$region0: #{tpu_custom_call.1}
  #allocation0 [shape = 'u32[]', space=smem, size = 0x4, offset = 0x4, fixed_abs, tag = 'smem constant byte address 0x4 - core index']
  #allocation1 [shape = 'u32[144,128]{1,0:T(1,128)}', space=vmem, size = 0x12000, scoped, tag = 'internal scratch']
  %s0 = inlined_call_operand.vmem [shape: f32[2,27,64], index: 0, kind: input, shape index: {}]
  %s1 = inlined_call_operand.vmem [shape: f32[13,27], index: 1, kind: input, shape index: {}]
  %s2 = inlined_call_operand.vmem [shape: f32[16,2], index: 2, kind: output, shape index: {}]
  %s3 = sld [smem:[#allocation0]]
  $region45: #{tpu_custom_call.1} parent=0
    _
  %s5 = ssub.s32 1, %s3
  %s6 = scalar_select 0, %s5, %s3
  loop: start=0, step=1, limit=4
  $region2: #{tpu_custom_call.1} parent=0 // loop_pre_header
    _
  $region3: #{tpu_custom_call.1} parent=0 // loop_header
    %s8 = sphi 0, %s12
    %p9 = scmp.ge.s32.totalorder %s8, 4
    %s15 = sphi 0, %s27
    %s16 = sphi 0, %s23
    %s17 = sphi 0, %s15
    %s18 = sphi 0, %s16
    %s19 = sphi 0, %s17
    %s20 = sphi 0, %s18
    %s32 = sphi 0, %s34
    %s35 = sphi 0, %s32
    %s36 = sphi 0, %s35
    %s52 = sphi 0, %s36
    %s56 = sphi 0, %s56
    %s58 = sphi 0, %s56
    %s59 = sphi 0, %s58
    %s73 = sphi 0, %s59
    %s77 = sphi 0, %s77
    %s79 = sphi 0, %s77
    %s80 = sphi 0, %s79
    %s94 = sphi 0, %s80
  $region4: #{tpu_custom_call.1} parent=0 // loop_header_branch
    %11 = sbr.rel (%p9) target = $region8
  $region5: #{tpu_custom_call.1} parent=0 // loop_body
    %s13 = ssub.s32 %s8, 1
    %s14 = ssub.s32 %s8, 2
    %s21 = sadd.s32 1, %s16
    %p22 = scmp.ge.s32.totalorder %s21, 1
    %s23 = scalar_select %p22, 0, %s21
    %s24 = sadd.s32 1, %s15
    %s25 = scalar_select %p22, %s24, %s15
    %p26 = scmp.ge.s32.totalorder %s25, 2
    %s27 = scalar_select %p26, 0, %s25
    %s28 = ssub.s32 %s15, %s27
    %s29 = ssub.s32 %s16, %s23
    %s30 = sor.u32 %s28, %s29
    %p31 = scmp.eq.s32.totalorder %s30, 0
    %s33 = sadd.s32 %s32, 1
    %s34 = scalar_select %p31, %s32, %s33
    %p37 = pneg %p31
    %p38 = scmp.eq.s32.totalorder %s8, 1
    %p39 = por %p37, %p38
    %p40 = scmp.ne.s32.totalorder %s32, %s35
    %p41 = scmp.eq.s32.totalorder %s8, 0
    %p42 = por %p40, %p41
    %p43 = scmp.ne.s32.totalorder %s32, %s35
    %p44 = scmp.eq.s32.totalorder %s13, 1
    %p45 = por %p43, %p44
    %p46 = scmp.ne.s32.totalorder %s35, %s36
    %p47 = scmp.eq.s32.totalorder %s13, 0
    %p48 = por %p46, %p47
    %p49 = scmp.ne.s32.totalorder %s35, %s36
    %p50 = scmp.eq.s32.totalorder %s14, 1
    %p51 = por %p49, %p50
    %p53 = scmp.ne.s32.totalorder %s36, %s52
    %p54 = scmp.eq.s32.totalorder %s14, 0
    %p55 = por %p53, %p54
    %s57 = sadd.s32 %s56, 1
    %p60 = scmp.eq.s32.totalorder %s8, 1
    %p61 = scmp.ne.s32.totalorder %s56, %s58
    %p62 = scmp.eq.s32.totalorder %s8, 0
    %p63 = por %p61, %p62
    %p64 = scmp.ne.s32.totalorder %s56, %s58
    %p65 = scmp.eq.s32.totalorder %s13, 1
    %p66 = por %p64, %p65
    %p67 = scmp.ne.s32.totalorder %s58, %s59
    %p68 = scmp.eq.s32.totalorder %s13, 0
    %p69 = por %p67, %p68
    %p70 = scmp.ne.s32.totalorder %s58, %s59
    %p71 = scmp.eq.s32.totalorder %s14, 1
    %p72 = por %p70, %p71
    %p74 = scmp.ne.s32.totalorder %s59, %s73
    %p75 = scmp.eq.s32.totalorder %s14, 0
    %p76 = por %p74, %p75
    %s78 = sadd.s32 %s77, 1
    %p81 = scmp.eq.s32.totalorder %s8, 1
    %p82 = scmp.ne.s32.totalorder %s77, %s79
    %p83 = scmp.eq.s32.totalorder %s8, 0
    %p84 = por %p82, %p83
    %p85 = scmp.ne.s32.totalorder %s77, %s79
    %p86 = scmp.eq.s32.totalorder %s13, 1
    %p87 = por %p85, %p86
    %p88 = scmp.ne.s32.totalorder %s79, %s80
    %p89 = scmp.eq.s32.totalorder %s13, 0
    %p90 = por %p88, %p89
    %p91 = scmp.ne.s32.totalorder %s79, %s80
    %p92 = scmp.eq.s32.totalorder %s14, 1
    %p93 = por %p91, %p92
    %p95 = scmp.ne.s32.totalorder %s80, %s94
    %p96 = scmp.eq.s32.totalorder %s14, 0
    %p97 = por %p95, %p96
    %p98 = scmp.le.s32.totalorder 1, %s8
    %p99 = scmp.lt.s32.totalorder %s8, 3
    %p100 = pnand %p98, %p99
    %p101 = pneg %p100
    // Predicated region
    $region9: #{tpu_custom_call.1} parent=5 // pred_check
      _
    $region10: #{tpu_custom_call.1} parent=5 // pred_check_branch
      %103 = sbr.rel (%p100) target = $region12
    $region11: #{tpu_custom_call.1} parent=5 // pred_region
      %s104 = ssub.s32 %s8, 1
      // Predicated region
      $region13: #{tpu_custom_call.1} parent=11 // pred_check
        %p105 = pneg %p69
      $region14: #{tpu_custom_call.1} parent=11 // pred_check_branch
        %107 = sbr.rel (%p105) target = $region16
      $region15: #{tpu_custom_call.1} parent=11 // pred_region
        _
      $region16: #{tpu_custom_call.1} parent=11 // pred_fallthru
        _
    $region12: #{tpu_custom_call.1} parent=5 // pred_fallthru
      _
    %p108 = scmp.lt.s32.totalorder %s8, 2
    // Predicated region
    $region17: #{tpu_custom_call.1} parent=5 // pred_check
      %p109 = pneg %p108
    $region18: #{tpu_custom_call.1} parent=5 // pred_check_branch
      %111 = sbr.rel (%p109) target = $region20
    $region19: #{tpu_custom_call.1} parent=5 // pred_region
      // Predicated region
      $region21: #{tpu_custom_call.1} parent=19 // pred_check
        %p112 = pneg %p42
      $region22: #{tpu_custom_call.1} parent=19 // pred_check_branch
        %114 = sbr.rel (%p112) target = $region24
      $region23: #{tpu_custom_call.1} parent=19 // pred_region
        %p115 = scmp.lt.s32.totalorder %s15, 1
        %s116 = scalar_select %p115, %s15, 1
        %p117 = scmp.lt.s32.totalorder %s16, 0
        %s118 = scalar_select %p117, %s16, 0
        %s119 = smul.addr %s116, 4
        %s120 = sadd.s32 %s118, %s119
        %s121 = smul.addr %s120, 8
        %s122 = scalar_lea.vmem %s0, %s121
      $region24: #{tpu_custom_call.1} parent=19 // pred_fallthru
        _
    $region20: #{tpu_custom_call.1} parent=5 // pred_fallthru
      _
    %p123 = scmp.le.s32.totalorder 1, %s8
    %p124 = scmp.lt.s32.totalorder %s8, 3
    %p125 = pnand %p123, %p124
    %p126 = pneg %p125
    // Predicated region
    $region25: #{tpu_custom_call.1} parent=5 // pred_check
      _
    $region26: #{tpu_custom_call.1} parent=5 // pred_check_branch
      %128 = sbr.rel (%p125) target = $region28
    $region27: #{tpu_custom_call.1} parent=5 // pred_region
      %s129 = ssub.s32 %s8, 1
      %p130 = scmp.lt.s32.totalorder %s17, 1
      %s131 = scalar_select %p130, %s17, 1
      %p132 = scmp.lt.s32.totalorder %s18, 0
      %s133 = scalar_select %p132, %s18, 0
      %s134 = smul.addr %s131, 4
      %s135 = sadd.s32 %s133, %s134
      %s136 = smul.addr %s135, 8
      %s137 = scalar_lea.vmem %s0, %s136
      %p138 = pneg %p48
      %p139 = pneg %p45
      %p140 = pneg %p69
      %p141 = pneg %p66
      %p142 = pneg %p90
      %p143 = pneg %p87
      %p144 = scmp.lt.s32.totalorder %s17, 1
      %s145 = scalar_select %p144, %s17, 1
      %p146 = scmp.lt.s32.totalorder %s18, 0
      %s147 = scalar_select %p146, %s18, 0
      %s148 = smul.addr %s145, 4
      %s149 = sadd.s32 %s147, %s148
      %s150 = smul.addr %s149, 8
      %s151 = scalar_lea.vmem %s0, %s150
      %v152 = vld [vmem:[%s151] sm:$0xff]
      %v153 = vld [vmem:[%s151 + $0x8] sm:$0xff]
      %v154 = vld [vmem:[%s151 + $0x10] sm:$0xff]
      %v155 = vld [vmem:[%s151 + $0x18] sm:$0x7]
      %vm156 = vcmp.eq.f32.partialorder %v152, -inf
      %vm157 = vcmp.eq.f32.partialorder %v153, -inf
      %vm158 = vcmp.eq.f32.partialorder %v154, -inf
      %vm159 = vcmp.eq.f32.partialorder %v155, -inf
      %v160 = vsel %vm156, 0.0, %v152
      %v161 = vsel %vm157, 0.0, %v153
      %v162 = vsel %vm158, 0.0, %v154
      %v163 = vsel %vm159, 0.0, %v155
      %v164 = vld [vmem:[%s1] sm:$0xff]
      %v165 = vld [vmem:[%s1 + $0x8] sm:$0x1f]
      %vm166 = vcmask 220160
      %v168 = vsel %vm166, %v164, 0
      %v171 = vsel %vm166, %v165, 0
      %vm173 = vcmask 1042432
      %v175 = vsel %vm173, %v163, 0
      %177 = vmatprep.subr.mxu0 0.0
      %178 = vmatpush1.msra.mxu0 %v160
      %179 = vmatprep.subr.mxu0 0.0
      %180 = vmatpush1.msra.mxu0 %v161
      %181 = vmatprep.subr.mxu0 0.0
      %182 = vmatpush1.msra.mxu0 %v162
      %183 = vmatprep.subr.mxu0 0.0
      %184 = vmatpush1.msra.mxu0 %v175
      %185 = vmatprep.subr.mxu0 0.0
      %186 = vmatpush1.msra.mxu0 0.0
      %187 = vmatprep.subr.mxu0 0.0
      %188 = vmatpush1.msra.mxu0 0.0
      %189 = vmatprep.subr.mxu0 0.0
      %190 = vmatpush1.msra.mxu0 0.0
      %191 = vmatprep.subr.mxu0 0.0
      %192 = vmatpush1.msra.mxu0 0.0
      %193 = vmatprep.subr.mxu0 0.0
      %194 = vmatpush1.msra.mxu0 0.0
      %195 = vmatprep.subr.mxu0 0.0
      %196 = vmatpush1.msra.mxu0 0.0
      %197 = vmatprep.subr.mxu0 0.0
      %198 = vmatpush1.msra.mxu0 0.0
      %199 = vmatprep.subr.mxu0 0.0
      %200 = vmatpush1.msra.mxu0 0.0
      %201 = vmatprep.subr.mxu0 0.0
      %202 = vmatpush1.msra.mxu0 0.0
      %203 = vmatprep.subr.mxu0 0.0
      %204 = vmatpush1.msra.mxu0 0.0
      %205 = vmatprep.subr.mxu0 0.0
      %206 = vmatpush1.msra.mxu0 0.0
      %207 = vmatprep.subr.mxu0 0.0
      %208 = vmatpush1.msra.mxu0 0.0
      %209 = vmatprep.subr.mxu0 0.0
      %210 = vmatpush1.msra.mxu0 0.0
      %211 = vmatprep.subr.mxu0 0.0
      %212 = vmatpush1.msra.mxu0 0.0
      %213 = vmatprep.subr.mxu0 0.0
      %214 = vmatpush1.msra.mxu0 0.0
      %215 = vmatprep.subr.mxu0 0.0
      %216 = vmatpush1.msra.mxu0 0.0
      %217 = vmatprep.subr.mxu0 0.0
      %218 = vmatpush1.msra.mxu0 0.0
      %219 = vmatprep.subr.mxu0 0.0
      %220 = vmatpush1.msra.mxu0 0.0
      %221 = vmatprep.subr.mxu0 0.0
      %222 = vmatpush1.msra.mxu0 0.0
      %223 = vmatprep.subr.mxu0 0.0
      %224 = vmatpush1.msra.mxu0 0.0
      %225 = vmatprep.subr.mxu0 0.0
      %226 = vmatpush1.msra.mxu0 0.0
      %227 = vmatprep.subr.mxu0 0.0
      %228 = vmatpush1.msra.mxu0 0.0
      %229 = vmatprep.subr.mxu0 0.0
      %230 = vmatpush1.msra.mxu0 0.0
      %231 = vmatprep.subr.mxu0 0.0
      %232 = vmatpush1.msra.mxu0 0.0
      %233 = vmatprep.subr.mxu0 0.0
      %234 = vmatpush1.msra.mxu0 0.0
      %235 = vmatprep.subr.mxu0 0.0
      %236 = vmatpush1.msra.mxu0 0.0
      %237 = vmatprep.subr.mxu0 0.0
      %238 = vmatpush1.msra.mxu0 0.0
      %239 = vmatprep.subr.mxu0 0.0
      %240 = vmatpush1.msra.mxu0 0.0
      %241 = vmatprep.mubr.f32.mxu0 0.0
      %242 = vmatmul.mubr.f32.gmra.mrb[0].mxu0 %v168
      %v243 = vpop.f32.mrb[0].mxu0
      %v244 = vadd.f32 0.0, %v243
      %v245 = vpop.f32.mrb[0].mxu0
      %246 = vmatprep.mubr.f32.mxu0 0.0
      %247 = vmatmul.mubr.f32.gmra.mrb[0].mxu0 %v171
      %v248 = vpop.f32.mrb[0].mxu0
      %v249 = vadd.f32 0.0, %v248
      %v250 = vpop.f32.mrb[0].mxu0
      %251 = vdwg.mxu0
      %v253 = vrot.slane %v152, 3
      %v255 = vmax.f32 %v152, %v253
      %v257 = vrot.slane %v153, 3
      %v259 = vmax.f32 %v152, %v257
      %v260 = vmax.f32 %v153, %v257
      %vm262 = vcmask 1044480
      %v263 = vrot.slane %v154, 3
      %v264 = vsel %vm262, %v257, %v263
      %v266 = vmax.f32 %v153, %v264
      %v268 = vmax.f32 %v154, %v263
      %vm271 = vcmask 1041408
      %v272 = vrot.slane %v259, 6
      %v273 = vrot.slane %v260, 6
      %v274 = vsel %vm271, %v272, %v273
      %v276 = vmax.f32 %v255, %v274
      %v278 = vrot.slane %v268, 6
      %v280 = vmax.f32 %v266, %v278
      %v282 = vrot.slane %v280, 4
      %v284 = vmax.f32 %v276, %v282
      %v285 = vmax.f32 %v284, %v155
      %v287 = vrot.slane %v285, 3
      %v289 = vsel %vm262, %v249, %v287
      %p290 = scmp.eq.s32.totalorder %s17, 0
      %p291 = scmp.eq.s32.totalorder %s18, 0
      %p292 = pnand %p290, %p291
      %p293 = pneg %p292
      // Predicated region
      $region29: #{tpu_custom_call.1} parent=27 // pred_check
        _
      $region30: #{tpu_custom_call.1} parent=27 // pred_check_branch
        %295 = sbr.rel (%p292) target = $region32
      $region31: #{tpu_custom_call.1} parent=27 // pred_region
        %vm296 = vcmask 15360
        %297 = vst.msk [vmem:[%s2] sm:$0xff] %vm296, 0.0
        %298 = vst.msk [vmem:[%s2 + $0x8] sm:$0xff] %vm296, 0.0
      $region32: #{tpu_custom_call.1} parent=27 // pred_fallthru
        _
      %vm299 = vcmask 523264
      %v300 = vsel %vm299, %v244, 0.0
      %301 = vadd.xlane.f32.xlu0 %v300
      %v302 = vpop.xlane.xlu0 %301
      %v303 = vsel %vm299, %v289, 0.0
      %304 = vadd.xlane.f32.xlu0 %v303
      %v305 = vpop.xlane.xlu0 %304
      %v306 = vmul.f32 %v244, %v244
      %v307 = vmul.f32 %v289, %v289
      %v308 = vsel %vm299, %v306, 0.0
      %309 = vadd.xlane.f32.xlu0 %v308
      %v310 = vpop.xlane.xlu0 %309
      %v311 = vsel %vm299, %v307, 0.0
      %312 = vadd.xlane.f32.xlu0 %v311
      %v313 = vpop.xlane.xlu0 %312
      %v314 = vld [vmem:[%s2] sm:$0xff]
      %v315 = vld [vmem:[%s2 + $0x8] sm:$0xff]
      %vm316 = vcmask 7168
      %v317 = vsel %vm316, %v302, %v310
      %v318 = vsel %vm316, %v305, %v313
      %v319 = vadd.f32 %v314, %v317
      %v320 = vadd.f32 %v315, %v318
      %vm321 = vcmask 15360
      %322 = vst.msk [vmem:[%s2] sm:$0xff] %vm321, %v319
      %323 = vst.msk [vmem:[%s2 + $0x8] sm:$0xff] %vm321, %v320
      // Predicated region
      $region33: #{tpu_custom_call.1} parent=27 // pred_check
        %p324 = pneg %p87
      $region34: #{tpu_custom_call.1} parent=27 // pred_check_branch
        %326 = sbr.rel (%p324) target = $region36
      $region35: #{tpu_custom_call.1} parent=27 // pred_region
        _
      $region36: #{tpu_custom_call.1} parent=27 // pred_fallthru
        _
      // Predicated region
      $region37: #{tpu_custom_call.1} parent=27 // pred_check
        %p327 = pneg %p87
      $region38: #{tpu_custom_call.1} parent=27 // pred_check_branch
        %329 = sbr.rel (%p327) target = $region40
      $region39: #{tpu_custom_call.1} parent=27 // pred_region
        _
      $region40: #{tpu_custom_call.1} parent=27 // pred_fallthru
        _
    $region28: #{tpu_custom_call.1} parent=5 // pred_fallthru
      _
    %p330 = scmp.le.s32.totalorder 2, %s8
    // Predicated region
    $region41: #{tpu_custom_call.1} parent=5 // pred_check
      %p331 = pneg %p330
    $region42: #{tpu_custom_call.1} parent=5 // pred_check_branch
      %333 = sbr.rel (%p331) target = $region44
    $region43: #{tpu_custom_call.1} parent=5 // pred_region
      %s334 = ssub.s32 %s8, 2
    $region44: #{tpu_custom_call.1} parent=5 // pred_fallthru
      _
  $region6: #{tpu_custom_call.1} parent=0 // loop_footer
    %s12 = sadd.s32 1, %s8
  $region7: #{tpu_custom_call.1} parent=0 // loop_footer_branch
    %7 = sbr.rel target = $region3
  $region8: #{tpu_custom_call.1} parent=0 // loop_exit
    _

</llo_original>
